<compile_context>
chip_gen: v7x
topology: tpu7x:2x2x1
jax: 0.10.0
libtpu: 0.0.40
codegen_flags: <defaults>
</compile_context>

<pallas_src>
import functools

import jax
import jax.numpy as jnp
from jax.experimental import pallas as pl
from jax.experimental.pallas import tpu as pltpu


LANE = 128
SPLIT = 2          # leading "parallel" grid axis: 2x on v7x, harmless on 1-TC chips
_LN2 = 0.6931471805599453


def _round_up(x, m):
    return ((x + m - 1) // m) * m


def _logcosh_kernel(w_ref, *refs, has_obs, has_data, mask_tail, n_valid, chunk):
    # refs layout: t, p, [obs_mask], [data_mask], num_out, [den_out]
    rest = list(refs)
    t_ref = rest.pop(0)
    p_ref = rest.pop(0)
    om_ref = rest.pop(0) if has_obs else None
    dm_ref = rest.pop(0) if has_data else None
    num_ref = rest.pop(0)
    den_ref = rest.pop(0) if has_data else None

    s = pl.program_id(0)       # parallel split (megacore on v7x)
    i = pl.program_id(1)       # reduction steps within the split

    @pl.when(i == 0)
    def _init():
        num_ref[...] = jnp.zeros_like(num_ref)
        if has_data:
            den_ref[...] = jnp.zeros_like(den_ref)

    t = t_ref[...].astype(jnp.float32)
    p = p_ref[...].astype(jnp.float32)
    x = (t - p) + 1e-12
    ax = jnp.abs(x)
    # log(cosh(x)) == |x| + log(1 + exp(-2|x|)) - log(2)  (overflow-free)
    err = ax + jnp.log(1.0 + jnp.exp(-2.0 * ax)) - _LN2

    if has_obs:
        om = om_ref[...].astype(jnp.float32)
        # weight = om*w - (om - 1) == om*(w - 1) + 1
        err = err * (om * (w_ref[0] - 1.0) + 1.0)

    if has_data:
        dm = dm_ref[...].astype(jnp.float32)
        num_c = err * dm
    else:
        dm = None
        num_c = err

    if mask_tail:
        # Zero contributions from anything past the true element count:
        # ragged-tail padding, out-of-bounds garbage of the last partial
        # block, and clamped duplicate grid points.  where-select (not mul)
        # so NaN/Inf garbage is also neutralized.
        tr, lane = num_c.shape
        base = (s * pl.num_programs(1) + i) * chunk
        ridx = jax.lax.broadcasted_iota(jnp.int32, (tr, lane), 0)
        cidx = jax.lax.broadcasted_iota(jnp.int32, (tr, lane), 1)
        valid = (base + ridx * lane + cidx) < n_valid
        num_c = jnp.where(valid, num_c, 0.0)
        if has_data:
            dm = jnp.where(valid, dm, 0.0)

    # Fold sublane groups: (tile_r, 128) -> (8, 128) per-lane partial sums.
    tr = num_c.shape[0]
    num_ref[...] += num_c.reshape(tr // 8, 8, LANE).sum(axis=0)
    if has_data:
        den_ref[...] += dm.reshape(tr // 8, 8, LANE).sum(axis=0)


def logcosh_loss(target, pred, obs_mask=None, data_mask=None,
                 obs_weight=1.0, tile_r=2048):
    """Pallas implementation of LogCoshLoss.forward. Returns a scalar f32."""
    assert target.shape == pred.shape
    n = target.size
    has_obs = obs_mask is not None
    has_data = data_mask is not None

    raw = [target, pred]
    if has_obs:
        raw.append(obs_mask)
    if has_data:
        raw.append(data_mask)

    def _stream_dtype(x):
        # bool masks are cast to f32 in the wrapper (lowest-risk path).
        return jnp.float32 if x.dtype == jnp.bool_ else x.dtype

    # Sublane multiple required by the narrowest streamed dtype.
    sub = max(8, max(32 // jnp.dtype(_stream_dtype(x)).itemsize for x in raw))

    # Flat length: multiple of LANE and at least `sub` rows.  jnp.pad (a full
    # HBM copy) is only emitted for awkward sizes (n % 128 != 0 or n < sub*128);
    # everything else is handled by in-kernel masking of the ragged tail.
    n_flat = max(_round_up(n, LANE), sub * LANE)
    needs_pad = (n_flat != n)
    rows = n_flat // LANE

    # Tile sizing: big tiles for real workloads, shrink for tiny inputs.
    tile_cap = _round_up(max(tile_r, sub), sub)
    tile_r_eff = max(sub, min(tile_cap, _round_up(pl.cdiv(rows, SPLIT), sub)))
    chunk = tile_r_eff * LANE
    nblk = pl.cdiv(rows, tile_r_eff)          # real row-tiles in the array
    steps = pl.cdiv(nblk, SPLIT)              # reduction steps per split
    coverage = SPLIT * steps * chunk          # virtual element range covered
    mask_tail = (coverage != n)               # any padding / OOB / duplicates?

    def prep(x):
        x = x.reshape(-1)
        if x.dtype == jnp.bool_:
            x = x.astype(jnp.float32)
        if needs_pad:
            x = jnp.pad(x, (0, n_flat - n))   # only for awkward sizes
        return x.reshape(rows, LANE)

    inputs = [prep(x) for x in raw]

    if SPLIT * steps == nblk:
        in_map = lambda s, i, w: (s * steps + i, 0)
    else:
        # Grid points past the last real block: clamp the DMA to the last
        # block (re-read <= 1 extra tile); their contribution is fully masked
        # in-kernel because their virtual base index is >= n.
        last = nblk - 1
        in_map = lambda s, i, w: (jnp.minimum(s * steps + i, last), 0)

    in_specs = [pl.BlockSpec((tile_r_eff, LANE), in_map) for _ in inputs]

    part = jax.ShapeDtypeStruct((SPLIT, 8, LANE), jnp.float32)
    out_map = lambda s, i, w: (s, 0, 0)
    if has_data:
        out_shape = (part, part)
        out_specs = (pl.BlockSpec((1, 8, LANE), out_map),
                     pl.BlockSpec((1, 8, LANE), out_map))
    else:
        out_shape = part
        out_specs = pl.BlockSpec((1, 8, LANE), out_map)

    kernel = functools.partial(
        _logcosh_kernel,
        has_obs=has_obs, has_data=has_data,
        mask_tail=mask_tail, n_valid=n, chunk=chunk,
    )

    w_arr = jnp.asarray(obs_weight, jnp.float32).reshape(1)

    res = pl.pallas_call(
        kernel,
        out_shape=out_shape,
        grid_spec=pltpu.PrefetchScalarGridSpec(
            num_scalar_prefetch=1,
            grid=(SPLIT, steps),
            in_specs=in_specs,
            out_specs=out_specs,
        ),
        compiler_params=pltpu.CompilerParams(
            dimension_semantics=("parallel", "arbitrary")),
    )(w_arr, *inputs)

    if has_data:
        num_parts, den_parts = res
        return jnp.sum(num_parts) / jnp.sum(den_parts)
    # data_mask is None -> plain mean over the true element count.
    return jnp.sum(res) / jnp.float32(n)


def _reference(target, pred, obs_mask=None, data_mask=None, obs_weight=1.0):
    err = target - pred
    err = jnp.log(jnp.cosh(err + 1e-12))
    if obs_mask is not None:
        weight = obs_mask * obs_weight - (obs_mask - 1.0)
        err = err * weight
    if data_mask is None:
        return jnp.mean(err)
    return jnp.sum(err * data_mask) / jnp.sum(data_mask)


if __name__ == "__main__":
    key = jax.random.PRNGKey(0)
    k1, k2, k3, k4, k5, k6, k7, k8 = jax.random.split(key, 8)

    B, C, H, W = 2, 4, 16, 16  # NCHW, matches a typical conv-output loss input
    target = jax.random.normal(k1, (B, C, H, W), jnp.float32)
    pred = jax.random.normal(k2, (B, C, H, W), jnp.float32)
    obs_mask = (jax.random.uniform(k3, (B, C, H, W)) > 0.5).astype(jnp.float32)
    data_mask = (jax.random.uniform(k4, (B, C, H, W)) > 0.3).astype(jnp.float32)

    # Case 1: both masks supplied, non-trivial obs_weight.
    out1 = jax.block_until_ready(
        logcosh_loss(target, pred, obs_mask, data_mask, obs_weight=2.0))
    ref1 = _reference(target, pred, obs_mask, data_mask, obs_weight=2.0)
    assert jnp.allclose(out1, ref1, rtol=1e-5, atol=1e-6), (out1, ref1)

    # Case 2: no masks (plain mean) — only target/pred are streamed.
    out2 = jax.block_until_ready(logcosh_loss(target, pred))
    ref2 = _reference(target, pred)
    assert jnp.allclose(out2, ref2, rtol=1e-5, atol=1e-6), (out2, ref2)

    # Case 3: obs_mask only, element count not a multiple of 128 — exercises
    # the (rare) wrapper-pad path plus in-kernel tail masking.
    shp = (2, 3, 15, 17)
    t3 = jax.random.normal(k5, shp, jnp.float32)
    p3 = jax.random.normal(k6, shp, jnp.float32)
    om3 = (jax.random.uniform(k3, shp) > 0.5).astype(jnp.float32)
    out3 = jax.block_until_ready(
        logcosh_loss(t3, p3, obs_mask=om3, obs_weight=3.0))
    ref3 = _reference(t3, p3, obs_mask=om3, obs_weight=3.0)
    assert jnp.allclose(out3, ref3, rtol=1e-5, atol=1e-6), (out3, ref3)

    # Case 4: data_mask only, n = 1280 (multiple of 128 but not of the row
    # tile) — exercises the zero-copy path with an out-of-bounds partial last
    # block masked in-kernel (numerator AND denominator).
    shp4 = (2, 4, 16, 10)
    t4 = jax.random.normal(k7, shp4, jnp.float32)
    p4 = jax.random.normal(k8, shp4, jnp.float32)
    dm4 = (jax.random.uniform(k4, shp4) > 0.4).astype(jnp.float32)
    out4 = jax.block_until_ready(logcosh_loss(t4, p4, data_mask=dm4))
    ref4 = _reference(t4, p4, data_mask=dm4)
    assert jnp.allclose(out4, ref4, rtol=1e-5, atol=1e-6), (out4, ref4)

    # Case 5: no masks, odd number of row tiles (nblk=5, SPLIT*steps=6) —
    # exercises the clamped index_map for the grid point past the end.
    shp5 = (5, 8, 16, 8)
    t5 = jax.random.normal(k1, shp5, jnp.float32)
    p5 = jax.random.normal(k2, shp5, jnp.float32)
    out5 = jax.block_until_ready(logcosh_loss(t5, p5, tile_r=8))
    ref5 = _reference(t5, p5)
    assert jnp.allclose(out5, ref5, rtol=1e-5, atol=1e-6), (out5, ref5)

    print("KERNEL_OK")
</pallas_src>

<mosaic_0001>
module attributes {stable_mosaic.version = 11 : i64} {
  func.func @_logcosh_kernel(%arg0: i32, %arg1: i32, %arg2: memref<1xf32, #tpu.memory_space<smem>>, %arg3: memref<8x128xf32, #tpu.memory_space<vmem>>, %arg4: memref<8x128xf32, #tpu.memory_space<vmem>>, %arg5: memref<8x128xf32, #tpu.memory_space<vmem>>, %arg6: memref<8x128xf32, #tpu.memory_space<vmem>>, %arg7: memref<1x8x128xf32, #tpu.memory_space<vmem>>, %arg8: memref<1x8x128xf32, #tpu.memory_space<vmem>>) attributes {dimension_semantics = [#tpu.dimension_semantics<parallel>, #tpu.dimension_semantics<arbitrary>], iteration_bounds = array<i64: 2, 1>, scalar_prefetch = 1 : i64, scratch_operands = 0 : i64, tpu.core_type = #tpu.core_type<tc>, window_params = [{transform_indices = @transform_0, window_bounds = array<i64: 8, 128>}, {transform_indices = @transform_1, window_bounds = array<i64: 8, 128>}, {transform_indices = @transform_2, window_bounds = array<i64: 8, 128>}, {transform_indices = @transform_3, window_bounds = array<i64: 8, 128>}, {transform_indices = @transform_4, window_bounds = array<i64: 1, 8, 128>}, {transform_indices = @transform_5, window_bounds = array<i64: 1, 8, 128>}]} {
    %c0_i32 = arith.constant 0 : i32
    %0 = arith.cmpi eq, %arg1, %c0_i32 : i32
    %1 = arith.extui %0 : i1 to i32
    %c0_i32_0 = arith.constant 0 : i32
    %2 = arith.cmpi ne, %1, %c0_i32_0 : i32
    scf.if %2 {
      %cst_28 = arith.constant 0.000000e+00 : f32
      %40 = vector.broadcast %cst_28 : f32 to vector<1x8x128xf32>
      %c0_29 = arith.constant 0 : index
      %c0_30 = arith.constant 0 : index
      %c0_31 = arith.constant 0 : index
      %41 = vector.load %arg7[%c0_29, %c0_30, %c0_31] : memref<1x8x128xf32, #tpu.memory_space<vmem>>, vector<1x8x128xf32>
      tpu.vector_store %arg7[%c0_29, %c0_30, %c0_31], %40 {strides = array<i32>} : memref<1x8x128xf32, #tpu.memory_space<vmem>>, vector<1x8x128xf32>,
      %cst_32 = arith.constant 0.000000e+00 : f32
      %42 = vector.broadcast %cst_32 : f32 to vector<1x8x128xf32>
      %c0_33 = arith.constant 0 : index
      %c0_34 = arith.constant 0 : index
      %c0_35 = arith.constant 0 : index
      %43 = vector.load %arg8[%c0_33, %c0_34, %c0_35] : memref<1x8x128xf32, #tpu.memory_space<vmem>>, vector<1x8x128xf32>
      tpu.vector_store %arg8[%c0_33, %c0_34, %c0_35], %42 {strides = array<i32>} : memref<1x8x128xf32, #tpu.memory_space<vmem>>, vector<1x8x128xf32>,
    } else {
    }
    %c0 = arith.constant 0 : index
    %c0_1 = arith.constant 0 : index
    %3 = vector.load %arg3[%c0, %c0_1] : memref<8x128xf32, #tpu.memory_space<vmem>>, vector<8x128xf32>
    %c0_2 = arith.constant 0 : index
    %c0_3 = arith.constant 0 : index
    %4 = vector.load %arg4[%c0_2, %c0_3] : memref<8x128xf32, #tpu.memory_space<vmem>>, vector<8x128xf32>
    %5 = arith.subf %3, %4 : vector<8x128xf32>
    %cst = arith.constant 9.99999996E-13 : f32
    %6 = vector.broadcast %cst : f32 to vector<8x128xf32>
    %7 = arith.addf %5, %6 : vector<8x128xf32>
    %8 = math.absf %7 : vector<8x128xf32>
    %cst_4 = arith.constant -2.000000e+00 : f32
    %9 = vector.broadcast %cst_4 : f32 to vector<8x128xf32>
    %10 = arith.mulf %9, %8 : vector<8x128xf32>
    %11 = math.exp %10 : vector<8x128xf32>
    %cst_5 = arith.constant 1.000000e+00 : f32
    %12 = vector.broadcast %cst_5 : f32 to vector<8x128xf32>
    %13 = arith.addf %12, %11 : vector<8x128xf32>
    %14 = math.log %13 : vector<8x128xf32>
    %15 = arith.addf %8, %14 : vector<8x128xf32>
    %cst_6 = arith.constant 0.693147182 : f32
    %16 = vector.broadcast %cst_6 : f32 to vector<8x128xf32>
    %17 = arith.subf %15, %16 : vector<8x128xf32>
    %c0_7 = arith.constant 0 : index
    %c0_8 = arith.constant 0 : index
    %18 = vector.load %arg5[%c0_7, %c0_8] : memref<8x128xf32, #tpu.memory_space<vmem>>, vector<8x128xf32>
    %c0_9 = arith.constant 0 : index
    %19 = memref.load %arg2[%c0_9] : memref<1xf32, #tpu.memory_space<smem>>
    %cst_10 = arith.constant 1.000000e+00 : f32
    %20 = arith.subf %19, %cst_10 : f32
    %21 = vector.broadcast %20 : f32 to vector<8x128xf32>
    %22 = arith.mulf %18, %21 : vector<8x128xf32>
    %cst_11 = arith.constant 1.000000e+00 : f32
    %23 = vector.broadcast %cst_11 : f32 to vector<8x128xf32>
    %24 = arith.addf %22, %23 : vector<8x128xf32>
    %25 = arith.mulf %17, %24 : vector<8x128xf32>
    %c0_12 = arith.constant 0 : index
    %c0_13 = arith.constant 0 : index
    %26 = vector.load %arg6[%c0_12, %c0_13] : memref<8x128xf32, #tpu.memory_space<vmem>>, vector<8x128xf32>
    %27 = arith.mulf %25, %26 : vector<8x128xf32>
    %c0_14 = arith.constant 0 : index
    %c0_15 = arith.constant 0 : index
    %c0_16 = arith.constant 0 : index
    %28 = vector.load %arg7[%c0_14, %c0_15, %c0_16] : memref<1x8x128xf32, #tpu.memory_space<vmem>>, vector<1x8x128xf32>
    %29 = vector.shape_cast %27 : vector<8x128xf32> to vector<1x8x128xf32>
    %cst_17 = arith.constant dense<0.000000e+00> : vector<8x128xf32>
    %30 = vector.multi_reduction <add>, %29, %cst_17 [0] : vector<1x8x128xf32> to vector<8x128xf32>
    %31 = vector.shape_cast %30 : vector<8x128xf32> to vector<1x8x128xf32>
    %32 = arith.addf %28, %31 : vector<1x8x128xf32>
    %c0_18 = arith.constant 0 : index
    %c0_19 = arith.constant 0 : index
    %c0_20 = arith.constant 0 : index
    %33 = vector.load %arg7[%c0_18, %c0_19, %c0_20] : memref<1x8x128xf32, #tpu.memory_space<vmem>>, vector<1x8x128xf32>
    tpu.vector_store %arg7[%c0_18, %c0_19, %c0_20], %32 {strides = array<i32>} : memref<1x8x128xf32, #tpu.memory_space<vmem>>, vector<1x8x128xf32>,
    %c0_21 = arith.constant 0 : index
    %c0_22 = arith.constant 0 : index
    %c0_23 = arith.constant 0 : index
    %34 = vector.load %arg8[%c0_21, %c0_22, %c0_23] : memref<1x8x128xf32, #tpu.memory_space<vmem>>, vector<1x8x128xf32>
    %35 = vector.shape_cast %26 : vector<8x128xf32> to vector<1x8x128xf32>
    %cst_24 = arith.constant dense<0.000000e+00> : vector<8x128xf32>
    %36 = vector.multi_reduction <add>, %35, %cst_24 [0] : vector<1x8x128xf32> to vector<8x128xf32>
    %37 = vector.shape_cast %36 : vector<8x128xf32> to vector<1x8x128xf32>
    %38 = arith.addf %34, %37 : vector<1x8x128xf32>
    %c0_25 = arith.constant 0 : index
    %c0_26 = arith.constant 0 : index
    %c0_27 = arith.constant 0 : index
    %39 = vector.load %arg8[%c0_25, %c0_26, %c0_27] : memref<1x8x128xf32, #tpu.memory_space<vmem>>, vector<1x8x128xf32>
    tpu.vector_store %arg8[%c0_25, %c0_26, %c0_27], %38 {strides = array<i32>} : memref<1x8x128xf32, #tpu.memory_space<vmem>>, vector<1x8x128xf32>,
    return
  }
  func.func @transform_0(%arg0: i32, %arg1: i32, %arg2: memref<1xf32, #tpu.memory_space<smem>>) -> (i32, i32) {
    %c1_i32 = arith.constant 1 : i32
    %0 = arith.muli %arg0, %c1_i32 : i32
    %1 = arith.addi %0, %arg1 : i32
    %c0_i32 = arith.constant 0 : i32
    %c0_i32_0 = arith.constant 0 : i32
    return %1, %c0_i32 : i32, i32
  }
  func.func @transform_1(%arg0: i32, %arg1: i32, %arg2: memref<1xf32, #tpu.memory_space<smem>>) -> (i32, i32) {
    %c1_i32 = arith.constant 1 : i32
    %0 = arith.muli %arg0, %c1_i32 : i32
    %1 = arith.addi %0, %arg1 : i32
    %c0_i32 = arith.constant 0 : i32
    %c0_i32_0 = arith.constant 0 : i32
    return %1, %c0_i32 : i32, i32
  }
  func.func @transform_2(%arg0: i32, %arg1: i32, %arg2: memref<1xf32, #tpu.memory_space<smem>>) -> (i32, i32) {
    %c1_i32 = arith.constant 1 : i32
    %0 = arith.muli %arg0, %c1_i32 : i32
    %1 = arith.addi %0, %arg1 : i32
    %c0_i32 = arith.constant 0 : i32
    %c0_i32_0 = arith.constant 0 : i32
    return %1, %c0_i32 : i32, i32
  }
  func.func @transform_3(%arg0: i32, %arg1: i32, %arg2: memref<1xf32, #tpu.memory_space<smem>>) -> (i32, i32) {
    %c1_i32 = arith.constant 1 : i32
    %0 = arith.muli %arg0, %c1_i32 : i32
    %1 = arith.addi %0, %arg1 : i32
    %c0_i32 = arith.constant 0 : i32
    %c0_i32_0 = arith.constant 0 : i32
    return %1, %c0_i32 : i32, i32
  }
  func.func @transform_4(%arg0: i32, %arg1: i32, %arg2: memref<1xf32, #tpu.memory_space<smem>>) -> (i32, i32, i32) {
    %c0_i32 = arith.constant 0 : i32
    %c0_i32_0 = arith.constant 0 : i32
    %c0_i32_1 = arith.constant 0 : i32
    return %arg0, %c0_i32, %c0_i32_0 : i32, i32, i32
  }
  func.func @transform_5(%arg0: i32, %arg1: i32, %arg2: memref<1xf32, #tpu.memory_space<smem>>) -> (i32, i32, i32) {
    %c0_i32 = arith.constant 0 : i32
    %c0_i32_0 = arith.constant 0 : i32
    %c0_i32_1 = arith.constant 0 : i32
    return %arg0, %c0_i32, %c0_i32_0 : i32, i32, i32
  }
}

</mosaic_0001>

<llo_original>
// kernel: tpu_custom_call.1
$region0: #{tpu_custom_call.1}
  #allocation0 [shape = 'u32[]', space=smem, size = 0x4, offset = 0x4, fixed_abs, tag = 'smem constant byte address 0x4 - core index']
  #allocation1 [shape = 'u32[144,128]{1,0:T(1,128)}', space=vmem, size = 0x12000, scoped, tag = 'internal scratch']
  #allocation2 [shape = 's32[1]{0}', space=sflag, size = 0x4, scoped, tag = 'scoped memory for tpu_custom_call.1']
  #allocation3 [shape = 'f32[1]{0:T(128)S(6)}', space=smem, size = 0x200, scoped, tag = 'prefetched SMEM operand 0']
  %s0 = inlined_call_operand.<no memory space> [shape: f32[1], index: 0, kind: input, shape index: {}]
  %s1 = inlined_call_operand.hbm [shape: f32[16,128], index: 1, kind: input, shape index: {}]
  %s2 = inlined_call_operand.hbm [shape: f32[16,128], index: 2, kind: input, shape index: {}]
  %s3 = inlined_call_operand.hbm [shape: f32[16,128], index: 3, kind: input, shape index: {}]
  %s4 = inlined_call_operand.hbm [shape: f32[16,128], index: 4, kind: input, shape index: {}]
  %s5 = inlined_call_operand.hbm [shape: f32[2,8,128], index: 5, kind: output, shape index: {0}]
  %s6 = inlined_call_operand.hbm [shape: f32[2,8,128], index: 6, kind: output, shape index: {1}]
  %7 = xla_tuple %s5, %s6
  %s8 = sld [smem:[#allocation0]]
  $region77: #{tpu_custom_call.1} parent=0
    _
  %s10 = ssub.s32 1, %s8
  %s11 = scalar_select 0, %s10, %s8
  %12 = sst [smem:[#allocation3]] %s0
  $region1: #{tpu_custom_call.1} parent=0
    #allocation4 [shape = 'u8[8192]{0}', space=vmem, size = 0x2000, scoped, tag = 'input window, operand 1']
    #allocation5 [shape = 's32[2]{0}', space=sflag, size = 0x8, scoped, tag = 'scoped memory for tpu_custom_call.1']
    #allocation6 [shape = 's32[2]{0}', space=sflag, size = 0x8, scoped, tag = 'scoped memory for tpu_custom_call.1']
    #allocation7 [shape = 'u8[8192]{0}', space=vmem, size = 0x2000, scoped, tag = 'input window, operand 2']
    #allocation8 [shape = 's32[2]{0}', space=sflag, size = 0x8, scoped, tag = 'scoped memory for tpu_custom_call.1']
    #allocation9 [shape = 'u8[8192]{0}', space=vmem, size = 0x2000, scoped, tag = 'input window, operand 3']
    #allocation10 [shape = 'u8[8192]{0}', space=vmem, size = 0x2000, scoped, tag = 'input window, operand 4']
    #allocation11 [shape = 's32[2]{0}', space=sflag, size = 0x8, scoped, tag = 'scoped memory for tpu_custom_call.1']
    #allocation12 [shape = 'u8[8192]{0}', space=vmem, size = 0x2000, scoped, tag = 'output window, operand 0']
    #allocation13 [shape = 'u8[8192]{0}', space=vmem, size = 0x2000, scoped, tag = 'output window, operand 1']
    #allocation14 [shape = 's32[2]{0}', space=sflag, size = 0x8, scoped, tag = 'scoped memory for tpu_custom_call.1']
    %13 = vsyncpa [#allocation5], 0
    %s14 = scalar_lea.sflag [#allocation5], 1
    %15 = vsyncpa %s14, 0
    %16 = vsyncpa [#allocation8], 0
    %s17 = scalar_lea.sflag [#allocation8], 1
    %18 = vsyncpa %s17, 0
    %19 = vsyncpa [#allocation11], 0
    %s20 = scalar_lea.sflag [#allocation11], 1
    %21 = vsyncpa %s20, 0
    %22 = vsyncpa [#allocation6], 0
    %s23 = scalar_lea.sflag [#allocation6], 1
    %24 = vsyncpa %s23, 0
    %25 = vsyncpa [#allocation14], 0
    %s26 = scalar_lea.sflag [#allocation14], 1
    %27 = vsyncpa %s26, 0
    loop: start=0, step=1, limit=4
    $region2: #{tpu_custom_call.1} parent=1 // loop_pre_header
      _
    $region3: #{tpu_custom_call.1} parent=1 // loop_header
      %s29 = sphi 0, %s33
      %p30 = scmp.ge.s32.totalorder %s29, 4
      %s36 = sphi 0, %s48
      %s37 = sphi 0, %s44
      %s38 = sphi 0, %s36
      %s39 = sphi 0, %s37
      %s40 = sphi 0, %s38
      %s41 = sphi 0, %s39
      %s53 = sphi 0, %s55
      %s56 = sphi 0, %s53
      %s57 = sphi 0, %s56
      %s73 = sphi 0, %s57
      %s81 = sphi 0, %s83
      %s84 = sphi 0, %s81
      %s85 = sphi 0, %s84
      %s101 = sphi 0, %s85
      %s109 = sphi 0, %s111
      %s112 = sphi 0, %s109
      %s113 = sphi 0, %s112
      %s129 = sphi 0, %s113
      %s137 = sphi 0, %s139
      %s140 = sphi 0, %s137
      %s141 = sphi 0, %s140
      %s157 = sphi 0, %s141
      %s163 = sphi 0, %s165
      %s166 = sphi 0, %s163
      %s167 = sphi 0, %s166
      %s183 = sphi 0, %s167
      %s189 = sphi 0, %s191
      %s192 = sphi 0, %s189
      %s193 = sphi 0, %s192
      %s209 = sphi 0, %s193
    $region4: #{tpu_custom_call.1} parent=1 // loop_header_branch
      %32 = sbr.rel (%p30) target = $region8
    $region5: #{tpu_custom_call.1} parent=1 // loop_body
      %s34 = ssub.s32 %s29, 1
      %s35 = ssub.s32 %s29, 2
      %s42 = sadd.s32 1, %s37
      %p43 = scmp.ge.s32.totalorder %s42, 1
      %s44 = scalar_select %p43, 0, %s42
      %s45 = sadd.s32 1, %s36
      %s46 = scalar_select %p43, %s45, %s36
      %p47 = scmp.ge.s32.totalorder %s46, 2
      %s48 = scalar_select %p47, 0, %s46
      %s49 = sadd.s32 %s36, %s37
      %s50 = sadd.s32 %s48, %s44
      %s51 = ssub.s32 %s49, %s50
      %p52 = scmp.eq.s32.totalorder %s51, 0
      %s54 = sadd.s32 %s53, 1
      %s55 = scalar_select %p52, %s53, %s54
      %p58 = pneg %p52
      %p59 = scmp.eq.s32.totalorder %s29, 1
      %p60 = por %p58, %p59
      %p61 = scmp.ne.s32.totalorder %s53, %s56
      %p62 = scmp.eq.s32.totalorder %s29, 0
      %p63 = por %p61, %p62
      %p64 = scmp.ne.s32.totalorder %s53, %s56
      %p65 = scmp.eq.s32.totalorder %s34, 1
      %p66 = por %p64, %p65
      %p67 = scmp.ne.s32.totalorder %s56, %s57
      %p68 = scmp.eq.s32.totalorder %s34, 0
      %p69 = por %p67, %p68
      %p70 = scmp.ne.s32.totalorder %s56, %s57
      %p71 = scmp.eq.s32.totalorder %s35, 1
      %p72 = por %p70, %p71
      %p74 = scmp.ne.s32.totalorder %s57, %s73
      %p75 = scmp.eq.s32.totalorder %s35, 0
      %p76 = por %p74, %p75
      %s77 = sadd.s32 %s36, %s37
      %s78 = sadd.s32 %s48, %s44
      %s79 = ssub.s32 %s77, %s78
      %p80 = scmp.eq.s32.totalorder %s79, 0
      %s82 = sadd.s32 %s81, 1
      %s83 = scalar_select %p80, %s81, %s82
      %p86 = pneg %p80
      %p87 = scmp.eq.s32.totalorder %s29, 1
      %p88 = por %p86, %p87
      %p89 = scmp.ne.s32.totalorder %s81, %s84
      %p90 = scmp.eq.s32.totalorder %s29, 0
      %p91 = por %p89, %p90
      %p92 = scmp.ne.s32.totalorder %s81, %s84
      %p93 = scmp.eq.s32.totalorder %s34, 1
      %p94 = por %p92, %p93
      %p95 = scmp.ne.s32.totalorder %s84, %s85
      %p96 = scmp.eq.s32.totalorder %s34, 0
      %p97 = por %p95, %p96
      %p98 = scmp.ne.s32.totalorder %s84, %s85
      %p99 = scmp.eq.s32.totalorder %s35, 1
      %p100 = por %p98, %p99
      %p102 = scmp.ne.s32.totalorder %s85, %s101
      %p103 = scmp.eq.s32.totalorder %s35, 0
      %p104 = por %p102, %p103
      %s105 = sadd.s32 %s36, %s37
      %s106 = sadd.s32 %s48, %s44
      %s107 = ssub.s32 %s105, %s106
      %p108 = scmp.eq.s32.totalorder %s107, 0
      %s110 = sadd.s32 %s109, 1
      %s111 = scalar_select %p108, %s109, %s110
      %p114 = pneg %p108
      %p115 = scmp.eq.s32.totalorder %s29, 1
      %p116 = por %p114, %p115
      %p117 = scmp.ne.s32.totalorder %s109, %s112
      %p118 = scmp.eq.s32.totalorder %s29, 0
      %p119 = por %p117, %p118
      %p120 = scmp.ne.s32.totalorder %s109, %s112
      %p121 = scmp.eq.s32.totalorder %s34, 1
      %p122 = por %p120, %p121
      %p123 = scmp.ne.s32.totalorder %s112, %s113
      %p124 = scmp.eq.s32.totalorder %s34, 0
      %p125 = por %p123, %p124
      %p126 = scmp.ne.s32.totalorder %s112, %s113
      %p127 = scmp.eq.s32.totalorder %s35, 1
      %p128 = por %p126, %p127
      %p130 = scmp.ne.s32.totalorder %s113, %s129
      %p131 = scmp.eq.s32.totalorder %s35, 0
      %p132 = por %p130, %p131
      %s133 = sadd.s32 %s36, %s37
      %s134 = sadd.s32 %s48, %s44
      %s135 = ssub.s32 %s133, %s134
      %p136 = scmp.eq.s32.totalorder %s135, 0
      %s138 = sadd.s32 %s137, 1
      %s139 = scalar_select %p136, %s137, %s138
      %p142 = pneg %p136
      %p143 = scmp.eq.s32.totalorder %s29, 1
      %p144 = por %p142, %p143
      %p145 = scmp.ne.s32.totalorder %s137, %s140
      %p146 = scmp.eq.s32.totalorder %s29, 0
      %p147 = por %p145, %p146
      %p148 = scmp.ne.s32.totalorder %s137, %s140
      %p149 = scmp.eq.s32.totalorder %s34, 1
      %p150 = por %p148, %p149
      %p151 = scmp.ne.s32.totalorder %s140, %s141
      %p152 = scmp.eq.s32.totalorder %s34, 0
      %p153 = por %p151, %p152
      %p154 = scmp.ne.s32.totalorder %s140, %s141
      %p155 = scmp.eq.s32.totalorder %s35, 1
      %p156 = por %p154, %p155
      %p158 = scmp.ne.s32.totalorder %s141, %s157
      %p159 = scmp.eq.s32.totalorder %s35, 0
      %p160 = por %p158, %p159
      %s161 = ssub.s32 %s36, %s48
      %p162 = scmp.eq.s32.totalorder %s161, 0
      %s164 = sadd.s32 %s163, 1
      %s165 = scalar_select %p162, %s163, %s164
      %p168 = pneg %p162
      %p169 = scmp.eq.s32.totalorder %s29, 1
      %p170 = por %p168, %p169
      %p171 = scmp.ne.s32.totalorder %s163, %s166
      %p172 = scmp.eq.s32.totalorder %s29, 0
      %p173 = por %p171, %p172
      %p174 = scmp.ne.s32.totalorder %s163, %s166
      %p175 = scmp.eq.s32.totalorder %s34, 1
      %p176 = por %p174, %p175
      %p177 = scmp.ne.s32.totalorder %s166, %s167
      %p178 = scmp.eq.s32.totalorder %s34, 0
      %p179 = por %p177, %p178
      %p180 = scmp.ne.s32.totalorder %s166, %s167
      %p181 = scmp.eq.s32.totalorder %s35, 1
      %p182 = por %p180, %p181
      %p184 = scmp.ne.s32.totalorder %s167, %s183
      %p185 = scmp.eq.s32.totalorder %s35, 0
      %p186 = por %p184, %p185
      %s187 = ssub.s32 %s36, %s48
      %p188 = scmp.eq.s32.totalorder %s187, 0
      %s190 = sadd.s32 %s189, 1
      %s191 = scalar_select %p188, %s189, %s190
      %p194 = pneg %p188
      %p195 = scmp.eq.s32.totalorder %s29, 1
      %p196 = por %p194, %p195
      %p197 = scmp.ne.s32.totalorder %s189, %s192
      %p198 = scmp.eq.s32.totalorder %s29, 0
      %p199 = por %p197, %p198
      %p200 = scmp.ne.s32.totalorder %s189, %s192
      %p201 = scmp.eq.s32.totalorder %s34, 1
      %p202 = por %p200, %p201
      %p203 = scmp.ne.s32.totalorder %s192, %s193
      %p204 = scmp.eq.s32.totalorder %s34, 0
      %p205 = por %p203, %p204
      %p206 = scmp.ne.s32.totalorder %s192, %s193
      %p207 = scmp.eq.s32.totalorder %s35, 1
      %p208 = por %p206, %p207
      %p210 = scmp.ne.s32.totalorder %s193, %s209
      %p211 = scmp.eq.s32.totalorder %s35, 0
      %p212 = por %p210, %p211
      %p213 = scmp.le.s32.totalorder 1, %s29
      %p214 = scmp.lt.s32.totalorder %s29, 3
      %p215 = pnand %p213, %p214
      %p216 = pneg %p215
      // Predicated region
      $region9: #{tpu_custom_call.1} parent=5 // pred_check
        _
      $region10: #{tpu_custom_call.1} parent=5 // pred_check_branch
        %218 = sbr.rel (%p215) target = $region12
      $region11: #{tpu_custom_call.1} parent=5 // pred_region
        %s219 = ssub.s32 %s29, 1
      $region12: #{tpu_custom_call.1} parent=5 // pred_fallthru
        _
      %p220 = scmp.lt.s32.totalorder %s29, 2
      // Predicated region
      $region13: #{tpu_custom_call.1} parent=5 // pred_check
        %p221 = pneg %p220
      $region14: #{tpu_custom_call.1} parent=5 // pred_check_branch
        %223 = sbr.rel (%p221) target = $region16
      $region15: #{tpu_custom_call.1} parent=5 // pred_region
        // Predicated region
        $region17: #{tpu_custom_call.1} parent=15 // pred_check
          %p224 = pneg %p63
        $region18: #{tpu_custom_call.1} parent=15 // pred_check_branch
          %226 = sbr.rel (%p224) target = $region20
        $region19: #{tpu_custom_call.1} parent=15 // pred_region
          %s227 = sand.u32 %s53, 1
          %s228 = scalar_lea.sflag [#allocation5], %s227
          %s229 = sand.u32 %s53, 1
          %s230 = smul.addr %s229, 8
          %s231 = scalar_lea.vmem [#allocation4], %s230
          %s232 = sadd.s32 %s36, %s37
          %s234 = ssub.s32 128, 128
          %235 = vsyncadd %s228, %s234
          %s236 = smul.addr %s232, 128
          %s237 = scalar_lea.hbm %s1, %s236
          %s239 = sshll.u32 %s231, 4
          %s240 = int_to_ptr.vmem [resolvable:$true] %s239
          %242 = dma.hbm_to_vmem [thread:$0]  %s237, 128, %s240, %s228
        $region20: #{tpu_custom_call.1} parent=15 // pred_fallthru
          _
        // Predicated region
        $region21: #{tpu_custom_call.1} parent=15 // pred_check
          %p243 = pneg %p91
        $region22: #{tpu_custom_call.1} parent=15 // pred_check_branch
          %245 = sbr.rel (%p243) target = $region24
        $region23: #{tpu_custom_call.1} parent=15 // pred_region
          %s246 = sand.u32 %s29, 1
          %s247 = scalar_lea.sflag [#allocation8], %s246
          %s248 = sand.u32 %s81, 1
          %s249 = smul.addr %s248, 8
          %s250 = scalar_lea.vmem [#allocation7], %s249
          %s251 = sadd.s32 %s36, %s37
          %s253 = ssub.s32 128, 128
          %254 = vsyncadd %s247, %s253
          %s255 = smul.addr %s251, 128
          %s256 = scalar_lea.hbm %s2, %s255
          %s258 = sshll.u32 %s250, 4
          %s259 = int_to_ptr.vmem [resolvable:$true] %s258
          %261 = dma.hbm_to_vmem [thread:$0]  %s256, 128, %s259, %s247
        $region24: #{tpu_custom_call.1} parent=15 // pred_fallthru
          _
        // Predicated region
        $region25: #{tpu_custom_call.1} parent=15 // pred_check
          %p262 = pneg %p119
        $region26: #{tpu_custom_call.1} parent=15 // pred_check_branch
          %264 = sbr.rel (%p262) target = $region28
        $region27: #{tpu_custom_call.1} parent=15 // pred_region
          %s265 = sand.u32 %s29, 1
          %s266 = scalar_lea.sflag [#allocation8], %s265
          %s267 = sand.u32 %s109, 1
          %s268 = smul.addr %s267, 8
          %s269 = scalar_lea.vmem [#allocation9], %s268
          %s270 = sadd.s32 %s36, %s37
          %s272 = ssub.s32 128, 128
          %273 = vsyncadd %s266, %s272
          %s274 = smul.addr %s270, 128
          %s275 = scalar_lea.hbm %s3, %s274
          %s277 = sshll.u32 %s269, 4
          %s278 = int_to_ptr.vmem [resolvable:$true] %s277
          %280 = dma.hbm_to_vmem [thread:$0]  %s275, 128, %s278, %s266
        $region28: #{tpu_custom_call.1} parent=15 // pred_fallthru
          _
        // Predicated region
        $region29: #{tpu_custom_call.1} parent=15 // pred_check
          %p281 = pneg %p147
        $region30: #{tpu_custom_call.1} parent=15 // pred_check_branch
          %283 = sbr.rel (%p281) target = $region32
        $region31: #{tpu_custom_call.1} parent=15 // pred_region
          %s284 = sand.u32 %s137, 1
          %s285 = scalar_lea.sflag [#allocation11], %s284
          %s286 = sand.u32 %s137, 1
          %s287 = smul.addr %s286, 8
          %s288 = scalar_lea.vmem [#allocation10], %s287
          %s289 = sadd.s32 %s36, %s37
          %s291 = ssub.s32 128, 128
          %292 = vsyncadd %s285, %s291
          %s293 = smul.addr %s289, 128
          %s294 = scalar_lea.hbm %s4, %s293
          %s296 = sshll.u32 %s288, 4
          %s297 = int_to_ptr.vmem [resolvable:$true] %s296
          %299 = dma.hbm_to_vmem [thread:$0]  %s294, 128, %s297, %s285
        $region32: #{tpu_custom_call.1} parent=15 // pred_fallthru
          _
      $region16: #{tpu_custom_call.1} parent=5 // pred_fallthru
        _
      %p300 = scmp.le.s32.totalorder 1, %s29
      %p301 = scmp.lt.s32.totalorder %s29, 3
      %p302 = pnand %p300, %p301
      %p303 = pneg %p302
      // Predicated region
      $region33: #{tpu_custom_call.1} parent=5 // pred_check
        _
      $region34: #{tpu_custom_call.1} parent=5 // pred_check_branch
        %305 = sbr.rel (%p302) target = $region36
      $region35: #{tpu_custom_call.1} parent=5 // pred_region
        %s306 = ssub.s32 %s29, 1
        %s307 = sand.u32 %s56, 1
        %s308 = scalar_lea.sflag [#allocation5], %s307
        %s309 = sand.u32 %s56, 1
        %s310 = smul.addr %s309, 8
        %s311 = scalar_lea.vmem [#allocation4], %s310
        // Predicated region
        $region37: #{tpu_custom_call.1} parent=35 // pred_check
          %p312 = pneg %p69
        $region38: #{tpu_custom_call.1} parent=35 // pred_check_branch
          %314 = sbr.rel (%p312) target = $region40
        $region39: #{tpu_custom_call.1} parent=35 // pred_region
          %315 = dma.done %s308, 128
        $region40: #{tpu_custom_call.1} parent=35 // pred_fallthru
          _
        %s316 = sand.u32 %s34, 1
        %s317 = scalar_lea.sflag [#allocation8], %s316
        %s318 = sand.u32 %s84, 1
        %s319 = smul.addr %s318, 8
        %s320 = scalar_lea.vmem [#allocation7], %s319
        // Predicated region
        $region41: #{tpu_custom_call.1} parent=35 // pred_check
          %p321 = pneg %p97
        $region42: #{tpu_custom_call.1} parent=35 // pred_check_branch
          %323 = sbr.rel (%p321) target = $region44
        $region43: #{tpu_custom_call.1} parent=35 // pred_region
          %324 = dma.done %s317, 128
        $region44: #{tpu_custom_call.1} parent=35 // pred_fallthru
          _
        %s325 = sand.u32 %s34, 1
        %s326 = scalar_lea.sflag [#allocation8], %s325
        %s327 = sand.u32 %s112, 1
        %s328 = smul.addr %s327, 8
        %s329 = scalar_lea.vmem [#allocation9], %s328
        // Predicated region
        $region45: #{tpu_custom_call.1} parent=35 // pred_check
          %p330 = pneg %p125
        $region46: #{tpu_custom_call.1} parent=35 // pred_check_branch
          %332 = sbr.rel (%p330) target = $region48
        $region47: #{tpu_custom_call.1} parent=35 // pred_region
          %333 = dma.done %s326, 128
        $region48: #{tpu_custom_call.1} parent=35 // pred_fallthru
          _
        %s334 = sand.u32 %s140, 1
        %s335 = scalar_lea.sflag [#allocation11], %s334
        %s336 = sand.u32 %s140, 1
        %s337 = smul.addr %s336, 8
        %s338 = scalar_lea.vmem [#allocation10], %s337
        // Predicated region
        $region49: #{tpu_custom_call.1} parent=35 // pred_check
          %p339 = pneg %p153
        $region50: #{tpu_custom_call.1} parent=35 // pred_check_branch
          %341 = sbr.rel (%p339) target = $region52
        $region51: #{tpu_custom_call.1} parent=35 // pred_region
          %342 = dma.done %s335, 128
        $region52: #{tpu_custom_call.1} parent=35 // pred_fallthru
          _
        %s343 = sand.u32 %s56, 1
        %s344 = scalar_lea.sflag [#allocation5], %s343
        %s345 = sand.u32 %s56, 1
        %s346 = smul.addr %s345, 8
        %s347 = scalar_lea.vmem [#allocation4], %s346
        %p348 = pneg %p69
        %p349 = pneg %p66
        %s350 = sand.u32 %s34, 1
        %s351 = scalar_lea.sflag [#allocation8], %s350
        %s352 = sand.u32 %s84, 1
        %s353 = smul.addr %s352, 8
        %s354 = scalar_lea.vmem [#allocation7], %s353
        %p355 = pneg %p97
        %p356 = pneg %p94
        %s357 = sand.u32 %s34, 1
        %s358 = scalar_lea.sflag [#allocation8], %s357
        %s359 = sand.u32 %s112, 1
        %s360 = smul.addr %s359, 8
        %s361 = scalar_lea.vmem [#allocation9], %s360
        %p362 = pneg %p125
        %p363 = pneg %p122
        %s364 = sand.u32 %s140, 1
        %s365 = scalar_lea.sflag [#allocation11], %s364
        %s366 = sand.u32 %s140, 1
        %s367 = smul.addr %s366, 8
        %s368 = scalar_lea.vmem [#allocation10], %s367
        %p369 = pneg %p153
        %p370 = pneg %p150
        %p371 = pneg %p179
        %p372 = pneg %p176
        %s373 = sand.u32 %s166, 1
        %s374 = scalar_lea.sflag [#allocation6], %s373
        %s375 = sand.u32 %s166, 1
        %s376 = smul.addr %s375, 8
        %s377 = scalar_lea.vmem [#allocation12], %s376
        %p378 = pneg %p205
        %p379 = pneg %p202
        %s380 = sand.u32 %s192, 1
        %s381 = scalar_lea.sflag [#allocation14], %s380
        %s382 = sand.u32 %s192, 1
        %s383 = smul.addr %s382, 8
        %s384 = scalar_lea.vmem [#allocation13], %s383
        %s385 = sadd.s32 %s38, %s39
        %s386 = sadd.s32 %s38, %s39
        %s387 = sadd.s32 %s38, %s39
        %s388 = sadd.s32 %s38, %s39
        %p389 = scmp.eq.s32.totalorder %s39, 0
        // Predicated region
        $region53: #{tpu_custom_call.1} parent=35 // pred_check
          %p390 = pneg %p389
        $region54: #{tpu_custom_call.1} parent=35 // pred_check_branch
          %392 = sbr.rel (%p390) target = $region56
        $region55: #{tpu_custom_call.1} parent=35 // pred_region
          %393 = vst [vmem:[%s377] sm:$0xff] 0.0
          %394 = vst [vmem:[%s384] sm:$0xff] 0.0
        $region56: #{tpu_custom_call.1} parent=35 // pred_fallthru
          _
        %v395 = vld [vmem:[%s311] sm:$0xff]
        %v396 = vld [vmem:[%s320] sm:$0xff]
        %v397 = vsub.f32 %v395, %v396
        %v398 = vadd.f32 %v397, 1e-12
        %v399 = vand.u32 2147483647, %v398
        %v400 = vmul.f32 %v399, -2.0
        %v401 = vmul.f32 %v400, 1.442695
        %v402 = vpow.pop %v401
        %v403 = vadd.f32 %v402, 1.0
        %v404 = vlog2.pop %v403
        %v405 = vmul.f32 %v404, 0.6931472
        %v406 = vadd.f32 %v399, %v405
        %v407 = vsub.f32 %v406, 0.6931472
        %v408 = vld [vmem:[%s329] sm:$0xff]
        %s409 = sld [smem:[#allocation3]]
        %s410 = ssub.f32 %s409, 1.0
        %v411 = vstv %s410
        %v412 = vmul.f32 %v408, %v411
        %v413 = vadd.f32 %v412, 1.0
        %v414 = vmul.f32 %v407, %v413
        %v415 = vld [vmem:[%s338] sm:$0xff]
        %v416 = vmul.f32 %v414, %v415
        %v417 = vld [vmem:[%s377] sm:$0xff]
        %v418 = vadd.f32 %v416, 0.0
        %v419 = vadd.f32 %v417, %v418
        %420 = vst [vmem:[%s377] sm:$0xff] %v419
        %v421 = vld [vmem:[%s384] sm:$0xff]
        %v422 = vadd.f32 %v415, 0.0
        %v423 = vadd.f32 %v421, %v422
        %424 = vst [vmem:[%s384] sm:$0xff] %v423
        %s425 = sand.u32 %s166, 1
        %s426 = scalar_lea.sflag [#allocation6], %s425
        %s427 = sand.u32 %s166, 1
        %s428 = smul.addr %s427, 8
        %s429 = scalar_lea.vmem [#allocation12], %s428
        %s430 = sand.u32 %s192, 1
        %s431 = scalar_lea.sflag [#allocation14], %s430
        %s432 = sand.u32 %s192, 1
        %s433 = smul.addr %s432, 8
        %s434 = scalar_lea.vmem [#allocation13], %s433
        // Predicated region
        $region57: #{tpu_custom_call.1} parent=35 // pred_check
          %p435 = pneg %p176
        $region58: #{tpu_custom_call.1} parent=35 // pred_check_branch
          %437 = sbr.rel (%p435) target = $region60
        $region59: #{tpu_custom_call.1} parent=35 // pred_region
          %s439 = ssub.s32 128, 128
          %440 = vsyncadd %s426, %s439
          %s441 = smul.addr %s38, 128
          %s442 = scalar_lea.hbm %s5, %s441
          %s444 = sshll.u32 %s429, 4
          %s445 = int_to_ptr.vmem [resolvable:$true] %s444
          %447 = dma.vmem_to_hbm [thread:$0]  %s445, 128, %s442, %s426
        $region60: #{tpu_custom_call.1} parent=35 // pred_fallthru
          _
        // Predicated region
        $region61: #{tpu_custom_call.1} parent=35 // pred_check
          %p448 = pneg %p202
        $region62: #{tpu_custom_call.1} parent=35 // pred_check_branch
          %450 = sbr.rel (%p448) target = $region64
        $region63: #{tpu_custom_call.1} parent=35 // pred_region
          %s452 = ssub.s32 128, 128
          %453 = vsyncadd %s431, %s452
          %s454 = smul.addr %s38, 128
          %s455 = scalar_lea.hbm %s6, %s454
          %s457 = sshll.u32 %s434, 4
          %s458 = int_to_ptr.vmem [resolvable:$true] %s457
          %460 = dma.vmem_to_hbm [thread:$0]  %s458, 128, %s455, %s431
        $region64: #{tpu_custom_call.1} parent=35 // pred_fallthru
          _
      $region36: #{tpu_custom_call.1} parent=5 // pred_fallthru
        _
      %p461 = scmp.le.s32.totalorder 2, %s29
      // Predicated region
      $region65: #{tpu_custom_call.1} parent=5 // pred_check
        %p462 = pneg %p461
      $region66: #{tpu_custom_call.1} parent=5 // pred_check_branch
        %464 = sbr.rel (%p462) target = $region68
      $region67: #{tpu_custom_call.1} parent=5 // pred_region
        %s465 = ssub.s32 %s29, 2
        // Predicated region
        $region69: #{tpu_custom_call.1} parent=67 // pred_check
          %p466 = pneg %p182
        $region70: #{tpu_custom_call.1} parent=67 // pred_check_branch
          %468 = sbr.rel (%p466) target = $region72
        $region71: #{tpu_custom_call.1} parent=67 // pred_region
          %s469 = sand.u32 %s167, 1
          %s470 = scalar_lea.sflag [#allocation6], %s469
          %s471 = sand.u32 %s167, 1
          %s472 = smul.addr %s471, 8
          %s473 = scalar_lea.vmem [#allocation12], %s472
          %474 = dma.done %s470, 128
        $region72: #{tpu_custom_call.1} parent=67 // pred_fallthru
          _
        // Predicated region
        $region73: #{tpu_custom_call.1} parent=67 // pred_check
          %p475 = pneg %p208
        $region74: #{tpu_custom_call.1} parent=67 // pred_check_branch
          %477 = sbr.rel (%p475) target = $region76
        $region75: #{tpu_custom_call.1} parent=67 // pred_region
          %s478 = sand.u32 %s193, 1
          %s479 = scalar_lea.sflag [#allocation14], %s478
          %s480 = sand.u32 %s193, 1
          %s481 = smul.addr %s480, 8
          %s482 = scalar_lea.vmem [#allocation13], %s481
          %483 = dma.done %s479, 128
        $region76: #{tpu_custom_call.1} parent=67 // pred_fallthru
          _
      $region68: #{tpu_custom_call.1} parent=5 // pred_fallthru
        _
    $region6: #{tpu_custom_call.1} parent=1 // loop_footer
      %s33 = sadd.s32 1, %s29
    $region7: #{tpu_custom_call.1} parent=1 // loop_footer_branch
      %28 = sbr.rel target = $region3
    $region8: #{tpu_custom_call.1} parent=1 // loop_exit
      _
    %484 = vsyncpa [#allocation5], 1
    %s485 = scalar_lea.sflag [#allocation5], 1
    %486 = vsyncpa %s485, 1
    %487 = vsyncpa [#allocation8], 1
    %s488 = scalar_lea.sflag [#allocation8], 1
    %489 = vsyncpa %s488, 1
    %490 = vsyncpa [#allocation11], 1
    %s491 = scalar_lea.sflag [#allocation11], 1
    %492 = vsyncpa %s491, 1
    %493 = vsyncpa [#allocation6], 1
    %s494 = scalar_lea.sflag [#allocation6], 1
    %495 = vsyncpa %s494, 1
    %496 = vsyncpa [#allocation14], 1
    %s497 = scalar_lea.sflag [#allocation14], 1
    %498 = vsyncpa %s497, 1

</llo_original>
